<compile_context>
chip_gen: v7x
topology: tpu7x:2x2x1
jax: 0.10.0
libtpu: 0.0.40
codegen_flags: <defaults>
</compile_context>

<pallas_src>
import jax
import jax.numpy as jnp
from jax.experimental import pallas as pl
from jax.experimental.pallas import tpu as pltpu

QUERY_DIM = 32     # scaled-down query_dim (ref default 512)
HEADS = 4
DIM_HEAD = 8       # scaled-down dim_head (ref default 64)
INNER = HEADS * DIM_HEAD
BATCH = 16


def _cross_attn_kernel(x_ref, wv_t_ref, wo_t_ref, bo_ref, o_ref):
    """y = (x @ Wv^T) @ Wo^T + bo.

    attn == softmax over a length-1 key axis == 1.0 exactly, so per-head output
    equals v bit-for-bit; q/k projections and the softmax are dead work and are
    elided (bit-identical for finite inputs). Weights arrive pre-transposed, so
    both matmuls feed the MXU with no in-kernel transpose.
    """
    x = x_ref[...]                                                      # (TB, QD)
    v = jnp.dot(x, wv_t_ref[...], preferred_element_type=jnp.float32)  # (TB, INNER)
    y = jnp.dot(v, wo_t_ref[...], preferred_element_type=jnp.float32)  # (TB, QD)
    y = y + bo_ref[...]                                                 # bias (1, QD)
    o_ref[...] = y.astype(o_ref.dtype)


def cross_attention_3d(x, wq, wk, wv, wo, bo, *, heads=HEADS, dim_head=DIM_HEAD,
                       tile_b=None):
    """Pallas forward for CrossAttention3D on 2-D x (B, query_dim).

    wq/wk are accepted for interface parity with the module but are provably
    unused: with seq len 1 the softmax is identically 1.0, so the output does
    not depend on them.
    """
    del wq, wk  # attn == 1.0 exactly for n == 1; q/k never affect the output.
    B, qd = x.shape
    inner = heads * dim_head
    if tile_b is None:
        tile_b = B                      # single grid step at these sizes
    assert B % tile_b == 0

    # Pre-transpose in the wrapper (layout plumbing, not compute) so the kernel
    # has no `.T` / XLU relayout re-executed per grid step.
    wv_t = jnp.asarray(wv).T            # (QD, INNER)
    wo_t = jnp.asarray(wo).T            # (INNER, QD)

    itemsize = jnp.dtype(x.dtype).itemsize
    cost = pl.CostEstimate(
        flops=4 * B * qd * inner,       # two matmuls: 2*B*QD*INNER each
        transcendentals=0,
        bytes_accessed=(x.size + wv_t.size + wo_t.size + bo.size + B * qd) * itemsize,
    )

    return pl.pallas_call(
        _cross_attn_kernel,
        out_shape=jax.ShapeDtypeStruct((B, qd), x.dtype),
        grid=(B // tile_b,),
        in_specs=[
            pl.BlockSpec((tile_b, qd), lambda i: (i, 0)),   # x tile
            pl.BlockSpec((qd, inner), lambda i: (0, 0)),    # Wv^T  (broadcast)
            pl.BlockSpec((inner, qd), lambda i: (0, 0)),    # Wo^T  (broadcast)
            pl.BlockSpec((1, qd), lambda i: (0, 0)),        # bias  (broadcast)
        ],
        out_specs=pl.BlockSpec((tile_b, qd), lambda i: (i, 0)),
        compiler_params=pltpu.CompilerParams(
            dimension_semantics=("parallel",)),
        cost_estimate=cost,
    )(x, wv_t, wo_t, bo)


def _reference(x, wq, wk, wv, wo, bo, heads=HEADS, dim_head=DIM_HEAD):
    """Pure-JAX replica of the FULL PyTorch forward (q/k/softmax included)."""
    scale = dim_head ** (-0.5)
    q = x @ wq.T
    k = x @ wk.T
    v = x @ wv.T
    B = x.shape[0]
    qh = q.reshape(B, heads, dim_head)
    kh = k.reshape(B, heads, dim_head)
    vh = v.reshape(B, heads, dim_head)
    sim = jnp.sum(qh * kh, axis=-1, keepdims=True) * scale    # (B, H, 1)
    attn = jax.nn.softmax(sim, axis=-1)                       # == 1.0
    out = (attn * vh).reshape(B, heads * dim_head)
    return out @ wo.T + bo[0]


if __name__ == "__main__":
    key = jax.random.PRNGKey(0)
    kx, kq, kk, kv, ko, kb = jax.random.split(key, 6)

    # Deterministic synthetic parameters (PyTorch Linear weight layout:
    # (out_features, in_features)). context_dim = max(context_dim, query_dim)
    # == QUERY_DIM here since both are equal.
    x = jax.random.normal(kx, (BATCH, QUERY_DIM), dtype=jnp.float32)
    wq = jax.random.normal(kq, (INNER, QUERY_DIM), dtype=jnp.float32) * 0.05
    wk = jax.random.normal(kk, (INNER, QUERY_DIM), dtype=jnp.float32) * 0.05
    wv = jax.random.normal(kv, (INNER, QUERY_DIM), dtype=jnp.float32) * 0.05
    wo = jax.random.normal(ko, (QUERY_DIM, INNER), dtype=jnp.float32) * 0.05
    bo = jax.random.normal(kb, (1, QUERY_DIM), dtype=jnp.float32) * 0.05

    out = cross_attention_3d(x, wq, wk, wv, wo, bo)
    out = jax.block_until_ready(out)

    ref = _reference(x, wq, wk, wv, wo, bo)
    assert out.shape == (BATCH, QUERY_DIM)
    assert jnp.allclose(out, ref, atol=1e-5, rtol=1e-5), "mismatch vs reference"

    print("KERNEL_OK")
</pallas_src>

<mosaic_0001>
module attributes {stable_mosaic.version = 11 : i64} {
  func.func @_cross_attn_kernel(%arg0: i32, %arg1: memref<16x32xf32, #tpu.memory_space<vmem>>, %arg2: memref<32x32xf32, #tpu.memory_space<vmem>>, %arg3: memref<32x32xf32, #tpu.memory_space<vmem>>, %arg4: memref<1x32xf32, #tpu.memory_space<vmem>>, %arg5: memref<16x32xf32, #tpu.memory_space<vmem>>) attributes {dimension_semantics = [#tpu.dimension_semantics<parallel>], iteration_bounds = array<i64: 1>, scalar_prefetch = 0 : i64, scratch_operands = 0 : i64, tpu.core_type = #tpu.core_type<tc>, window_params = [{transform_indices = @transform_0, window_bounds = array<i64: 16, 32>}, {pipeline_mode = #tpu.pipeline_mode<synchronous>, transform_indices = @transform_1, window_bounds = array<i64: 32, 32>}, {pipeline_mode = #tpu.pipeline_mode<synchronous>, transform_indices = @transform_2, window_bounds = array<i64: 32, 32>}, {pipeline_mode = #tpu.pipeline_mode<synchronous>, transform_indices = @transform_3, window_bounds = array<i64: 1, 32>}, {transform_indices = @transform_4, window_bounds = array<i64: 16, 32>}]} {
    %c0 = arith.constant 0 : index
    %c0_0 = arith.constant 0 : index
    %0 = vector.load %arg1[%c0, %c0_0] : memref<16x32xf32, #tpu.memory_space<vmem>>, vector<16x32xf32>
    %c0_1 = arith.constant 0 : index
    %c0_2 = arith.constant 0 : index
    %1 = vector.load %arg2[%c0_1, %c0_2] : memref<32x32xf32, #tpu.memory_space<vmem>>, vector<32x32xf32>
    %cst = arith.constant dense<0.000000e+00> : vector<16x32xf32>
    %2 = tpu.matmul %0, %1, %cst {dimension_numbers = #tpu.dot_dimension_numbers<[1], [0], [0], [1], [0, 0, 1, 1], [], []>} : vector<16x32xf32>, vector<32x32xf32>, vector<16x32xf32> -> vector<16x32xf32>
    %c0_3 = arith.constant 0 : index
    %c0_4 = arith.constant 0 : index
    %3 = vector.load %arg3[%c0_3, %c0_4] : memref<32x32xf32, #tpu.memory_space<vmem>>, vector<32x32xf32>
    %cst_5 = arith.constant dense<0.000000e+00> : vector<16x32xf32>
    %4 = tpu.matmul %2, %3, %cst_5 {dimension_numbers = #tpu.dot_dimension_numbers<[1], [0], [0], [1], [0, 0, 1, 1], [], []>} : vector<16x32xf32>, vector<32x32xf32>, vector<16x32xf32> -> vector<16x32xf32>
    %c0_6 = arith.constant 0 : index
    %c0_7 = arith.constant 0 : index
    %5 = vector.load %arg4[%c0_6, %c0_7] : memref<1x32xf32, #tpu.memory_space<vmem>>, vector<1x32xf32>
    %6 = vector.broadcast %5 : vector<1x32xf32> to vector<16x32xf32>
    %7 = arith.addf %4, %6 : vector<16x32xf32>
    %c0_8 = arith.constant 0 : index
    %c0_9 = arith.constant 0 : index
    %8 = vector.load %arg5[%c0_8, %c0_9] : memref<16x32xf32, #tpu.memory_space<vmem>>, vector<16x32xf32>
    tpu.vector_store %arg5[%c0_8, %c0_9], %7 {strides = array<i32>} : memref<16x32xf32, #tpu.memory_space<vmem>>, vector<16x32xf32>,
    return
  }
  func.func @transform_0(%arg0: i32) -> (i32, i32) {
    %c0_i32 = arith.constant 0 : i32
    %c0_i32_0 = arith.constant 0 : i32
    return %arg0, %c0_i32 : i32, i32
  }
  func.func @transform_1(%arg0: i32) -> (i32, i32) {
    %c0_i32 = arith.constant 0 : i32
    %c0_i32_0 = arith.constant 0 : i32
    %c0_i32_1 = arith.constant 0 : i32
    return %c0_i32, %c0_i32_0 : i32, i32
  }
  func.func @transform_2(%arg0: i32) -> (i32, i32) {
    %c0_i32 = arith.constant 0 : i32
    %c0_i32_0 = arith.constant 0 : i32
    %c0_i32_1 = arith.constant 0 : i32
    return %c0_i32, %c0_i32_0 : i32, i32
  }
  func.func @transform_3(%arg0: i32) -> (i32, i32) {
    %c0_i32 = arith.constant 0 : i32
    %c0_i32_0 = arith.constant 0 : i32
    %c0_i32_1 = arith.constant 0 : i32
    return %c0_i32, %c0_i32_0 : i32, i32
  }
  func.func @transform_4(%arg0: i32) -> (i32, i32) {
    %c0_i32 = arith.constant 0 : i32
    %c0_i32_0 = arith.constant 0 : i32
    return %arg0, %c0_i32 : i32, i32
  }
}

</mosaic_0001>

<llo_original>
// kernel: tpu_custom_call.1
$region0: #{tpu_custom_call.1}
  #allocation0 [shape = 'u32[]', space=smem, size = 0x4, offset = 0x4, fixed_abs, tag = 'smem constant byte address 0x4 - core index']
  #allocation1 [shape = 'u32[144,128]{1,0:T(1,128)}', space=vmem, size = 0x12000, scoped, tag = 'internal scratch']
  %s0 = inlined_call_operand.hbm [shape: f32[16,32], index: 0, kind: input, shape index: {}]
  %s1 = inlined_call_operand.hbm [shape: f32[32,32], index: 1, kind: input, shape index: {}]
  %s2 = inlined_call_operand.hbm [shape: f32[32,32], index: 2, kind: input, shape index: {}]
  %s3 = inlined_call_operand.vmem [shape: f32[1,32], index: 3, kind: input, shape index: {}]
  %s4 = inlined_call_operand.hbm [shape: f32[16,32], index: 4, kind: output, shape index: {}]
  %s5 = sld [smem:[#allocation0]]
  $region38: #{tpu_custom_call.1} parent=0
    _
  %s7 = ssub.s32 1, %s5
  %s8 = scalar_select 0, %s7, %s5
  $region1: #{tpu_custom_call.1} parent=0
    #allocation2 [shape = 'u8[8192]{0}', space=vmem, size = 0x2000, scoped, tag = 'input window, operand 0, single buffered']
    #allocation3 [shape = 's32[1]{0}', space=sflag, size = 0x4, scoped, tag = 'scoped memory for tpu_custom_call.1']
    #allocation4 [shape = 's32[1]{0}', space=sflag, size = 0x4, scoped, tag = 'scoped memory for tpu_custom_call.1']
    #allocation5 [shape = 'u8[16384]{0}', space=vmem, size = 0x4000, scoped, tag = 'input window, operand 1, single buffered']
    #allocation6 [shape = 's32[1]{0}', space=sflag, size = 0x4, scoped, tag = 'scoped memory for tpu_custom_call.1']
    #allocation7 [shape = 'u8[16384]{0}', space=vmem, size = 0x4000, scoped, tag = 'input window, operand 2, single buffered']
    #allocation8 [shape = 'u8[8192]{0}', space=vmem, size = 0x2000, scoped, tag = 'output window, operand 0, single buffered']
    %9 = vsyncpa [#allocation3], 0
    %10 = vsyncpa [#allocation6], 0
    %11 = vsyncpa [#allocation4], 0
    // Predicated region
    $region2: #{tpu_custom_call.1} parent=1 // pred_check
      _
    $region3: #{tpu_custom_call.1} parent=1 // pred_check_branch
      %13 = sbr.rel (0) target = $region5
    $region4: #{tpu_custom_call.1} parent=1 // pred_region
      %s15 = ssub.s32 256, 256
      %16 = vsyncadd [#allocation3], %s15
      %s17 = sshll.u32 [#allocation2], 4
      %s18 = int_to_ptr.vmem [resolvable:$true] %s17
      %23 = dma.hbm_to_vmem [thread:$0]  %s0, 256, %s18, [#allocation3], 128, 128, 8
    $region5: #{tpu_custom_call.1} parent=1 // pred_fallthru
      _
    // Predicated region
    $region6: #{tpu_custom_call.1} parent=1 // pred_check
      _
    $region7: #{tpu_custom_call.1} parent=1 // pred_check_branch
      %25 = sbr.rel (0) target = $region9
    $region8: #{tpu_custom_call.1} parent=1 // pred_region
      %s27 = ssub.s32 512, 512
      %28 = vsyncadd [#allocation6], %s27
      %s29 = sshll.u32 [#allocation5], 4
      %s30 = int_to_ptr.vmem [resolvable:$true] %s29
      %35 = dma.hbm_to_vmem [thread:$0]  %s1, 512, %s30, [#allocation6], 128, 128, 8
    $region9: #{tpu_custom_call.1} parent=1 // pred_fallthru
      _
    // Predicated region
    $region10: #{tpu_custom_call.1} parent=1 // pred_check
      _
    $region11: #{tpu_custom_call.1} parent=1 // pred_check_branch
      %37 = sbr.rel (0) target = $region13
    $region12: #{tpu_custom_call.1} parent=1 // pred_region
      %s39 = ssub.s32 512, 512
      %40 = vsyncadd [#allocation6], %s39
      %s41 = sshll.u32 [#allocation7], 4
      %s42 = int_to_ptr.vmem [resolvable:$true] %s41
      %47 = dma.hbm_to_vmem [thread:$0]  %s2, 512, %s42, [#allocation6], 128, 128, 8
    $region13: #{tpu_custom_call.1} parent=1 // pred_fallthru
      _
    // Predicated region
    $region14: #{tpu_custom_call.1} parent=1 // pred_check
      _
    $region15: #{tpu_custom_call.1} parent=1 // pred_check_branch
      %49 = sbr.rel (0) target = $region17
    $region16: #{tpu_custom_call.1} parent=1 // pred_region
      _
    $region17: #{tpu_custom_call.1} parent=1 // pred_fallthru
      _
    // Predicated region
    $region18: #{tpu_custom_call.1} parent=1 // pred_check
      _
    $region19: #{tpu_custom_call.1} parent=1 // pred_check_branch
      %51 = sbr.rel (0) target = $region21
    $region20: #{tpu_custom_call.1} parent=1 // pred_region
      %52 = dma.done [#allocation3], 256
    $region21: #{tpu_custom_call.1} parent=1 // pred_fallthru
      _
    // Predicated region
    $region22: #{tpu_custom_call.1} parent=1 // pred_check
      _
    $region23: #{tpu_custom_call.1} parent=1 // pred_check_branch
      %54 = sbr.rel (0) target = $region25
    $region24: #{tpu_custom_call.1} parent=1 // pred_region
      %55 = dma.done [#allocation6], 512
    $region25: #{tpu_custom_call.1} parent=1 // pred_fallthru
      _
    // Predicated region
    $region26: #{tpu_custom_call.1} parent=1 // pred_check
      _
    $region27: #{tpu_custom_call.1} parent=1 // pred_check_branch
      %57 = sbr.rel (0) target = $region29
    $region28: #{tpu_custom_call.1} parent=1 // pred_region
      %58 = dma.done [#allocation6], 512
    $region29: #{tpu_custom_call.1} parent=1 // pred_fallthru
      _
    %v59 = vld [vmem:[#allocation2] sm:$0xff]
    %v60 = vld [vmem:[#allocation2 + $0x8] sm:$0xff]
    %v61 = vld [vmem:[#allocation5] sm:$0xff]
    %v62 = vld [vmem:[#allocation5 + $0x8] sm:$0xff]
    %v63 = vld [vmem:[#allocation5 + $0x10] sm:$0xff]
    %v64 = vld [vmem:[#allocation5 + $0x18] sm:$0xff]
    %vm65 = vcmask 261120
    %v67 = vsel %vm65, %v59, 0
    %v70 = vsel %vm65, %v60, 0
    %72 = vmatprep.subr.mxu0 0.0
    %73 = vmatpush1.msra.mxu0 %v61
    %74 = vmatprep.subr.mxu0 0.0
    %75 = vmatpush1.msra.mxu0 %v62
    %76 = vmatprep.subr.mxu0 0.0
    %77 = vmatpush1.msra.mxu0 %v63
    %78 = vmatprep.subr.mxu0 0.0
    %79 = vmatpush1.msra.mxu0 %v64
    %80 = vmatprep.subr.mxu0 0.0
    %81 = vmatpush1.msra.mxu0 0.0
    %82 = vmatprep.subr.mxu0 0.0
    %83 = vmatpush1.msra.mxu0 0.0
    %84 = vmatprep.subr.mxu0 0.0
    %85 = vmatpush1.msra.mxu0 0.0
    %86 = vmatprep.subr.mxu0 0.0
    %87 = vmatpush1.msra.mxu0 0.0
    %88 = vmatprep.subr.mxu0 0.0
    %89 = vmatpush1.msra.mxu0 0.0
    %90 = vmatprep.subr.mxu0 0.0
    %91 = vmatpush1.msra.mxu0 0.0
    %92 = vmatprep.subr.mxu0 0.0
    %93 = vmatpush1.msra.mxu0 0.0
    %94 = vmatprep.subr.mxu0 0.0
    %95 = vmatpush1.msra.mxu0 0.0
    %96 = vmatprep.subr.mxu0 0.0
    %97 = vmatpush1.msra.mxu0 0.0
    %98 = vmatprep.subr.mxu0 0.0
    %99 = vmatpush1.msra.mxu0 0.0
    %100 = vmatprep.subr.mxu0 0.0
    %101 = vmatpush1.msra.mxu0 0.0
    %102 = vmatprep.subr.mxu0 0.0
    %103 = vmatpush1.msra.mxu0 0.0
    %104 = vmatprep.subr.mxu0 0.0
    %105 = vmatpush1.msra.mxu0 0.0
    %106 = vmatprep.subr.mxu0 0.0
    %107 = vmatpush1.msra.mxu0 0.0
    %108 = vmatprep.subr.mxu0 0.0
    %109 = vmatpush1.msra.mxu0 0.0
    %110 = vmatprep.subr.mxu0 0.0
    %111 = vmatpush1.msra.mxu0 0.0
    %112 = vmatprep.subr.mxu0 0.0
    %113 = vmatpush1.msra.mxu0 0.0
    %114 = vmatprep.subr.mxu0 0.0
    %115 = vmatpush1.msra.mxu0 0.0
    %116 = vmatprep.subr.mxu0 0.0
    %117 = vmatpush1.msra.mxu0 0.0
    %118 = vmatprep.subr.mxu0 0.0
    %119 = vmatpush1.msra.mxu0 0.0
    %120 = vmatprep.subr.mxu0 0.0
    %121 = vmatpush1.msra.mxu0 0.0
    %122 = vmatprep.subr.mxu0 0.0
    %123 = vmatpush1.msra.mxu0 0.0
    %124 = vmatprep.subr.mxu0 0.0
    %125 = vmatpush1.msra.mxu0 0.0
    %126 = vmatprep.subr.mxu0 0.0
    %127 = vmatpush1.msra.mxu0 0.0
    %128 = vmatprep.subr.mxu0 0.0
    %129 = vmatpush1.msra.mxu0 0.0
    %130 = vmatprep.subr.mxu0 0.0
    %131 = vmatpush1.msra.mxu0 0.0
    %132 = vmatprep.subr.mxu0 0.0
    %133 = vmatpush1.msra.mxu0 0.0
    %134 = vmatprep.subr.mxu0 0.0
    %135 = vmatpush1.msra.mxu0 0.0
    %136 = vmatprep.mubr.f32.mxu0 0.0
    %137 = vmatmul.mubr.f32.gmra.mrb[0].mxu0 %v67
    %v138 = vpop.f32.mrb[0].mxu0
    %v139 = vadd.f32 0.0, %v138
    %v140 = vpop.f32.mrb[0].mxu0
    %141 = vmatprep.mubr.f32.mxu0 0.0
    %142 = vmatmul.mubr.f32.gmra.mrb[0].mxu0 %v70
    %v143 = vpop.f32.mrb[0].mxu0
    %v144 = vadd.f32 0.0, %v143
    %v145 = vpop.f32.mrb[0].mxu0
    %146 = vdwg.mxu0
    %v147 = vld [vmem:[#allocation7] sm:$0xff]
    %v148 = vld [vmem:[#allocation7 + $0x8] sm:$0xff]
    %v149 = vld [vmem:[#allocation7 + $0x10] sm:$0xff]
    %v150 = vld [vmem:[#allocation7 + $0x18] sm:$0xff]
    %v151 = vld [vmem:[%s3] sm:$0x1]
    %v153 = vlaneseq
    %v154 = vshrl.u32 %v153, 7
    %v155 = vsub.s32 0, %v154
    %v156 = vrot.slane %v151, %v155
    %v159 = vsel %vm65, %v139, 0
    %v162 = vsel %vm65, %v144, 0
    %164 = vmatprep.subr.mxu0 0.0
    %165 = vmatpush1.msra.mxu0 %v147
    %166 = vmatprep.subr.mxu0 0.0
    %167 = vmatpush1.msra.mxu0 %v148
    %168 = vmatprep.subr.mxu0 0.0
    %169 = vmatpush1.msra.mxu0 %v149
    %170 = vmatprep.subr.mxu0 0.0
    %171 = vmatpush1.msra.mxu0 %v150
    %172 = vmatprep.subr.mxu0 0.0
    %173 = vmatpush1.msra.mxu0 0.0
    %174 = vmatprep.subr.mxu0 0.0
    %175 = vmatpush1.msra.mxu0 0.0
    %176 = vmatprep.subr.mxu0 0.0
    %177 = vmatpush1.msra.mxu0 0.0
    %178 = vmatprep.subr.mxu0 0.0
    %179 = vmatpush1.msra.mxu0 0.0
    %180 = vmatprep.subr.mxu0 0.0
    %181 = vmatpush1.msra.mxu0 0.0
    %182 = vmatprep.subr.mxu0 0.0
    %183 = vmatpush1.msra.mxu0 0.0
    %184 = vmatprep.subr.mxu0 0.0
    %185 = vmatpush1.msra.mxu0 0.0
    %186 = vmatprep.subr.mxu0 0.0
    %187 = vmatpush1.msra.mxu0 0.0
    %188 = vmatprep.subr.mxu0 0.0
    %189 = vmatpush1.msra.mxu0 0.0
    %190 = vmatprep.subr.mxu0 0.0
    %191 = vmatpush1.msra.mxu0 0.0
    %192 = vmatprep.subr.mxu0 0.0
    %193 = vmatpush1.msra.mxu0 0.0
    %194 = vmatprep.subr.mxu0 0.0
    %195 = vmatpush1.msra.mxu0 0.0
    %196 = vmatprep.subr.mxu0 0.0
    %197 = vmatpush1.msra.mxu0 0.0
    %198 = vmatprep.subr.mxu0 0.0
    %199 = vmatpush1.msra.mxu0 0.0
    %200 = vmatprep.subr.mxu0 0.0
    %201 = vmatpush1.msra.mxu0 0.0
    %202 = vmatprep.subr.mxu0 0.0
    %203 = vmatpush1.msra.mxu0 0.0
    %204 = vmatprep.subr.mxu0 0.0
    %205 = vmatpush1.msra.mxu0 0.0
    %206 = vmatprep.subr.mxu0 0.0
    %207 = vmatpush1.msra.mxu0 0.0
    %208 = vmatprep.subr.mxu0 0.0
    %209 = vmatpush1.msra.mxu0 0.0
    %210 = vmatprep.subr.mxu0 0.0
    %211 = vmatpush1.msra.mxu0 0.0
    %212 = vmatprep.subr.mxu0 0.0
    %213 = vmatpush1.msra.mxu0 0.0
    %214 = vmatprep.subr.mxu0 0.0
    %215 = vmatpush1.msra.mxu0 0.0
    %216 = vmatprep.subr.mxu0 0.0
    %217 = vmatpush1.msra.mxu0 0.0
    %218 = vmatprep.subr.mxu0 0.0
    %219 = vmatpush1.msra.mxu0 0.0
    %220 = vmatprep.subr.mxu0 0.0
    %221 = vmatpush1.msra.mxu0 0.0
    %222 = vmatprep.subr.mxu0 0.0
    %223 = vmatpush1.msra.mxu0 0.0
    %224 = vmatprep.subr.mxu0 0.0
    %225 = vmatpush1.msra.mxu0 0.0
    %226 = vmatprep.subr.mxu0 0.0
    %227 = vmatpush1.msra.mxu0 0.0
    %228 = vmatprep.mubr.f32.mxu0 0.0
    %229 = vmatmul.mubr.f32.gmra.mrb[0].mxu0 %v159
    %v230 = vpop.f32.mrb[0].mxu0
    %v231 = vadd.f32 %v156, %v230
    %v232 = vpop.f32.mrb[0].mxu0
    %233 = vmatprep.mubr.f32.mxu0 0.0
    %234 = vmatmul.mubr.f32.gmra.mrb[0].mxu0 %v162
    %v235 = vpop.f32.mrb[0].mxu0
    %v236 = vadd.f32 %v156, %v235
    %v237 = vpop.f32.mrb[0].mxu0
    %238 = vdwg.mxu0
    %239 = vst.msk [vmem:[#allocation8] sm:$0xff] %vm65, %v231
    %240 = vst.msk [vmem:[#allocation8 + $0x8] sm:$0xff] %vm65, %v236
    // Predicated region
    $region30: #{tpu_custom_call.1} parent=1 // pred_check
      _
    $region31: #{tpu_custom_call.1} parent=1 // pred_check_branch
      %242 = sbr.rel (0) target = $region33
    $region32: #{tpu_custom_call.1} parent=1 // pred_region
      %s244 = ssub.s32 256, 256
      %245 = vsyncadd [#allocation4], %s244
      %s246 = sshll.u32 [#allocation8], 4
      %s247 = int_to_ptr.vmem [resolvable:$true] %s246
      %252 = dma.vmem_to_hbm [thread:$0]  %s247, 256, %s4, [#allocation4], 128, 128, 8
    $region33: #{tpu_custom_call.1} parent=1 // pred_fallthru
      _
    // Predicated region
    $region34: #{tpu_custom_call.1} parent=1 // pred_check
      _
    $region35: #{tpu_custom_call.1} parent=1 // pred_check_branch
      %254 = sbr.rel (0) target = $region37
    $region36: #{tpu_custom_call.1} parent=1 // pred_region
      %255 = dma.done [#allocation4], 256
    $region37: #{tpu_custom_call.1} parent=1 // pred_fallthru
      _
    %256 = vsyncpa [#allocation3], 1
    %257 = vsyncpa [#allocation6], 1
    %258 = vsyncpa [#allocation4], 1

</llo_original>
